<compile_context>
chip_gen: v7x
topology: tpu7x:2x2x1
jax: 0.10.0
libtpu: 0.0.40
codegen_flags: <defaults>
</compile_context>

<pallas_src>
import functools
import math

import jax
import jax.numpy as jnp
from jax import lax
from jax.experimental import pallas as pl
from jax.experimental.pallas import tpu as pltpu


@functools.lru_cache(maxsize=None)
def _vmem_limit_bytes():
    """Per-generation scoped-VMEM limit (safe fallback on CPU/interpret)."""
    try:
        if jax.devices()[0].platform != "tpu":
            return 32 * 1024 * 1024
        cap = pltpu.get_tpu_info().vmem_capacity_bytes
    except Exception:
        return 32 * 1024 * 1024
    if cap >= 128 * 1024 * 1024:     # v5e / v6e: 128 MiB physical
        return 96 * 1024 * 1024
    return 48 * 1024 * 1024          # v7x: 64 MiB physical per TC


def _pick_tile(dim, preferred, min_blocks=1):
    """Largest 128-multiple divisor of dim <= preferred, leaving >= min_blocks
    blocks when possible (keeps the megacore 'parallel' axes busy on v7x)."""
    assert dim % 128 == 0, dim
    cands = [t for t in range(128, dim + 1, 128) if dim % t == 0]
    good = [t for t in cands if t <= preferred and dim // t >= min_blocks]
    if good:
        return max(good)
    ok = [t for t in cands if t <= preferred]
    if ok:
        return max(ok)
    return min(cands)


# ----------------------------------------------------------------------------
# Kernel A: row-tiled feature matmul  O = (X [* mask]) @ W   (W VMEM-resident)
# ----------------------------------------------------------------------------
def _feat_matmul_kernel(x_ref, w_ref, o_ref):
    o_ref[...] = jnp.dot(x_ref[...], w_ref[...],
                         preferred_element_type=jnp.float32).astype(o_ref.dtype)


def _feat_dropout_matmul_kernel(x_ref, mask_ref, w_ref, o_ref):
    # mask is pre-scaled bf16 (0 or 1/keep): a single bf16 VPU multiply,
    # no int->float conversions, no f32 up/down-casts.
    h = x_ref[...] * mask_ref[...]
    o_ref[...] = jnp.dot(h, w_ref[...],
                         preferred_element_type=jnp.float32).astype(o_ref.dtype)


def feat_matmul(x, w, mask=None, *, tm=512):
    n, din = x.shape
    din2, dout = w.shape
    assert din == din2
    tm = _pick_tile(n, tm, min_blocks=2)

    x_spec = pl.BlockSpec((tm, din), lambda i: (i, 0))
    w_spec = pl.BlockSpec((din, dout), lambda i: (0, 0))
    if mask is None:
        kernel = _feat_matmul_kernel
        in_specs = [x_spec, w_spec]
        args = (x, w)
        in_bytes = n * din * 2
    else:
        kernel = _feat_dropout_matmul_kernel
        in_specs = [x_spec, pl.BlockSpec((tm, din), lambda i: (i, 0)), w_spec]
        args = (x, mask, w)
        in_bytes = 2 * n * din * 2

    flops = 2 * n * din * dout
    bytes_accessed = in_bytes + din * dout * 2 + n * dout * 2

    return pl.pallas_call(
        kernel,
        out_shape=jax.ShapeDtypeStruct((n, dout), jnp.bfloat16),
        grid_spec=pltpu.PrefetchScalarGridSpec(
            num_scalar_prefetch=0,
            grid=(n // tm,),
            in_specs=in_specs,
            out_specs=pl.BlockSpec((tm, dout), lambda i: (i, 0)),
        ),
        compiler_params=pltpu.CompilerParams(
            dimension_semantics=("parallel",),
            vmem_limit_bytes=_vmem_limit_bytes()),
        cost_estimate=pl.CostEstimate(flops=flops, transcendentals=0,
                                      bytes_accessed=bytes_accessed),
    )(*args)


# ----------------------------------------------------------------------------
# Kernel B: H1 = relu(adj @ X1)   (pure adjacency matmul, ReLU in the epilogue)
# ----------------------------------------------------------------------------
def _adj_relu_kernel(adj_ref, x_ref, o_ref, acc_ref):
    k = pl.program_id(2)

    @pl.when(k == 0)
    def _():
        acc_ref[...] = jnp.zeros_like(acc_ref)

    acc_ref[...] += jnp.dot(adj_ref[...], x_ref[...],
                            preferred_element_type=jnp.float32)

    @pl.when(k == pl.num_programs(2) - 1)
    def _():
        o_ref[...] = jnp.maximum(acc_ref[...], 0.0).astype(o_ref.dtype)


def adj_matmul_relu(adj, x, *, tm=512, tn=512, tk=1024):
    n, n2 = adj.shape
    n3, h = x.shape
    assert n == n2 == n3
    tm = _pick_tile(n, tm, min_blocks=2)
    tk = _pick_tile(n, tk)
    # Full output width whenever it is small: adj then streams from HBM once.
    tn = h if h <= 512 else _pick_tile(h, tn)
    passes = h // tn

    flops = 2 * n * n * h
    bytes_accessed = (passes * n * n * 2            # adj (re-read h//tn times)
                      + (n // tm) * n * h * 2       # X1 re-read per row block
                      + n * h * 2)                  # output

    return pl.pallas_call(
        _adj_relu_kernel,
        out_shape=jax.ShapeDtypeStruct((n, h), jnp.bfloat16),
        grid_spec=pltpu.PrefetchScalarGridSpec(
            num_scalar_prefetch=0,
            grid=(n // tm, h // tn, n // tk),
            in_specs=[
                pl.BlockSpec((tm, tk), lambda i, j, k: (i, k)),   # adj
                pl.BlockSpec((tk, tn), lambda i, j, k: (k, j)),   # X1
            ],
            out_specs=pl.BlockSpec((tm, tn), lambda i, j, k: (i, j)),
            scratch_shapes=[pltpu.VMEM((tm, tn), jnp.float32)],
        ),
        compiler_params=pltpu.CompilerParams(
            dimension_semantics=("parallel", "parallel", "arbitrary"),
            vmem_limit_bytes=_vmem_limit_bytes()),
        cost_estimate=pl.CostEstimate(flops=flops, transcendentals=0,
                                      bytes_accessed=bytes_accessed),
    )(adj, x)


# ----------------------------------------------------------------------------
# Kernel C: H2 = adj @ Y; mu/logvar split + reparameterize in the epilogue
# ----------------------------------------------------------------------------
def _reparam_epilogue(acc, eps, mu_ref, logvar_ref, z_ref, d2):
    mu = acc[:, :d2]
    logvar = acc[:, d2:]
    mu_ref[...] = mu
    logvar_ref[...] = logvar
    if eps is None:                       # eval: z = mu
        z = mu
    else:                                 # train: z = mu + eps * exp(0.5*logvar)
        z = mu + eps * jnp.exp(0.5 * logvar)
    z_ref[...] = z.astype(z_ref.dtype)


def _adj_reparam_train_kernel(adj_ref, y_ref, eps_ref,
                              mu_ref, logvar_ref, z_ref, acc_ref, *, d2):
    k = pl.program_id(1)

    @pl.when(k == 0)
    def _():
        acc_ref[...] = jnp.zeros_like(acc_ref)

    acc_ref[...] += jnp.dot(adj_ref[...], y_ref[...],
                            preferred_element_type=jnp.float32)

    @pl.when(k == pl.num_programs(1) - 1)
    def _():
        _reparam_epilogue(acc_ref[...], eps_ref[...],
                          mu_ref, logvar_ref, z_ref, d2)


def _adj_reparam_eval_kernel(adj_ref, y_ref,
                             mu_ref, logvar_ref, z_ref, acc_ref, *, d2):
    k = pl.program_id(1)

    @pl.when(k == 0)
    def _():
        acc_ref[...] = jnp.zeros_like(acc_ref)

    acc_ref[...] += jnp.dot(adj_ref[...], y_ref[...],
                            preferred_element_type=jnp.float32)

    @pl.when(k == pl.num_programs(1) - 1)
    def _():
        _reparam_epilogue(acc_ref[...], None, mu_ref, logvar_ref, z_ref, d2)


def adj_matmul_reparam(adj, y, eps, *, d2, training, tm=512, tk=1024):
    n, n2 = adj.shape
    n3, two_d2 = y.shape
    assert n == n2 == n3 and two_d2 == 2 * d2
    assert d2 % 128 == 0  # TODO(synk): pad d2 for lane-clean mu/logvar split
    tm = _pick_tile(n, tm, min_blocks=2)
    tk = _pick_tile(n, tk)

    in_specs = [
        pl.BlockSpec((tm, tk), lambda i, k: (i, k)),        # adj (read once)
        pl.BlockSpec((tk, two_d2), lambda i, k: (k, 0)),    # Y
    ]
    args = [adj, y]
    if training:
        in_specs.append(pl.BlockSpec((tm, d2), lambda i, k: (i, 0)))
        args.append(eps)
        kernel = functools.partial(_adj_reparam_train_kernel, d2=d2)
    else:
        kernel = functools.partial(_adj_reparam_eval_kernel, d2=d2)

    flops = 2 * n * n * two_d2
    bytes_accessed = (n * n * 2
                      + (n // tm) * n * two_d2 * 2
                      + n * d2 * (4 + 4 + 2)
                      + (n * d2 * 4 if training else 0))

    out_shapes = (jax.ShapeDtypeStruct((n, d2), jnp.float32),   # mu
                  jax.ShapeDtypeStruct((n, d2), jnp.float32),   # logvar
                  jax.ShapeDtypeStruct((n, d2), jnp.bfloat16))  # z
    out_specs = [pl.BlockSpec((tm, d2), lambda i, k: (i, 0))] * 3

    return pl.pallas_call(
        kernel,
        out_shape=out_shapes,
        grid_spec=pltpu.PrefetchScalarGridSpec(
            num_scalar_prefetch=0,
            grid=(n // tm, n // tk),
            in_specs=in_specs,
            out_specs=out_specs,
            scratch_shapes=[pltpu.VMEM((tm, two_d2), jnp.float32)],
        ),
        compiler_params=pltpu.CompilerParams(
            dimension_semantics=("parallel", "arbitrary"),
            vmem_limit_bytes=_vmem_limit_bytes()),
        cost_estimate=pl.CostEstimate(
            flops=flops, transcendentals=(n * d2 if training else 0),
            bytes_accessed=bytes_accessed),
    )(*args)


# ----------------------------------------------------------------------------
# Kernel D: decode  out = z[:n_users] @ z[n_users:].T
#           (transpose folded into dot_general; user/item split folded into the
#            index_map row offsets so no HBM slice copies of z are made)
# ----------------------------------------------------------------------------
def _decode_kernel(zu_ref, zi_ref, o_ref):
    o_ref[...] = lax.dot_general(
        zu_ref[...], zi_ref[...],
        dimension_numbers=(((1,), (1,)), ((), ())),
        preferred_element_type=jnp.float32).astype(o_ref.dtype)


def decode_matmul(z, n_users, *, tm=512, tn=512, out_dtype=jnp.float32):
    # out_dtype=jnp.bfloat16 halves the dominant HBM write traffic if the
    # downstream loss tolerates it; kept f32 to match the reference semantics.
    n, d2 = z.shape
    m_u = n_users
    m_i = n - n_users
    tm = _pick_tile(m_u, tm, min_blocks=2)
    tn = _pick_tile(m_i, tn, min_blocks=2)
    if n_users % tn != 0:        # item blocks must start on a tile boundary
        tn = 128
    assert m_u % tm == 0 and m_i % tn == 0 and n_users % tn == 0
    off = n_users // tn          # block offset of the first item row

    flops = 2 * m_u * m_i * d2
    bytes_accessed = ((m_i // tn) * m_u * d2 * 2
                      + (m_u // tm) * m_i * d2 * 2
                      + m_u * m_i * jnp.dtype(out_dtype).itemsize)

    return pl.pallas_call(
        _decode_kernel,
        out_shape=jax.ShapeDtypeStruct((m_u, m_i), out_dtype),
        grid_spec=pltpu.PrefetchScalarGridSpec(
            num_scalar_prefetch=0,
            grid=(m_u // tm, m_i // tn),
            in_specs=[
                pl.BlockSpec((tm, d2), lambda i, j: (i, 0)),        # user rows
                pl.BlockSpec((tn, d2), lambda i, j: (off + j, 0)),  # item rows
            ],
            out_specs=pl.BlockSpec((tm, tn), lambda i, j: (i, j)),
        ),
        compiler_params=pltpu.CompilerParams(
            dimension_semantics=("parallel", "parallel"),
            vmem_limit_bytes=_vmem_limit_bytes()),
        cost_estimate=pl.CostEstimate(flops=flops, transcendentals=0,
                                      bytes_accessed=bytes_accessed),
    )(z, z)


# ----------------------------------------------------------------------------
# VGAE forward
# ----------------------------------------------------------------------------
class VGAEPallas:
    def __init__(self, adj, n_users, p_dims, q_dims=None, dropout=0.2, *, key):
        self.n_users = n_users
        self.p_dims = p_dims
        self.q_dims = q_dims if q_dims else p_dims[::-1]
        assert self.q_dims[0] == p_dims[-1] and self.q_dims[-1] == p_dims[0]
        self.dropout = float(dropout)
        self.adj = adj.astype(jnp.bfloat16)     # dense normalized adjacency

        input_dim, hidden1_dim, hidden2_dim = p_dims[2], p_dims[1], p_dims[0]
        self.hidden2_dim = hidden2_dim
        self.n_nodes = adj.shape[0]

        k_emb, k_w1, k_w2 = jax.random.split(key, 3)
        # nn.Embedding weight, init normal(std=0.1)
        self.embeddings = (0.1 * jax.random.normal(
            k_emb, (self.n_nodes, input_dim), dtype=jnp.float32)
        ).astype(jnp.bfloat16)
        # glorot_init: normal(0, sqrt(2 / (in + out)))
        self.w1 = (jax.random.normal(k_w1, (input_dim, hidden1_dim), jnp.float32)
                   * math.sqrt(2.0 / (input_dim + hidden1_dim))
                   ).astype(jnp.bfloat16)
        self.w2 = (jax.random.normal(k_w2, (hidden1_dim, 2 * hidden2_dim),
                                     jnp.float32)
                   * math.sqrt(2.0 / (hidden1_dim + 2 * hidden2_dim))
                   ).astype(jnp.bfloat16)

    def forward(self, key, training=True):
        k_drop, k_eps = jax.random.split(key)
        d2 = self.q_dims[-1]
        n, din = self.embeddings.shape

        # --- layer 1 precompute: X1 = dropout(E) @ W1 (dropout fused in-kernel,
        #     mask generated once with jax.random — no TPU-only PRNG primitives).
        if training and self.dropout > 0.0:
            keep = 1.0 - self.dropout
            mask = (jax.random.bernoulli(k_drop, keep, (n, din))
                    .astype(jnp.float32) * (1.0 / keep)).astype(jnp.bfloat16)
            x1 = feat_matmul(self.embeddings, self.w1, mask=mask)
        else:
            x1 = feat_matmul(self.embeddings, self.w1)

        # --- base_gcn: H1 = relu(adj @ X1)
        hidden = adj_matmul_relu(self.adj, x1)

        # --- layer 2 precompute: Y = H1 @ W2
        y = feat_matmul(hidden, self.w2)

        # --- gcn_mean + mu/logvar split + reparameterize
        eps = (jax.random.normal(k_eps, (n, d2), dtype=jnp.float32)
               if training else None)
        mu, logvar, z = adj_matmul_reparam(self.adj, y, eps,
                                           d2=d2, training=training)

        # --- decode: z[:n_users] @ z[n_users:].T (split folded into index_map)
        recon = decode_matmul(z, self.n_users)
        return recon, mu, logvar


def _make_adj(key, n_nodes):
    """Dense symmetric-normalized adjacency: D^-1/2 (A + I) D^-1/2."""
    a = jax.random.bernoulli(key, p=0.1,
                             shape=(n_nodes, n_nodes)).astype(jnp.float32)
    a = jnp.maximum(a, a.T)
    a = a + jnp.eye(n_nodes, dtype=jnp.float32)
    deg = jnp.sum(a, axis=1)
    d_inv_sqrt = 1.0 / jnp.sqrt(deg)
    return a * d_inv_sqrt[:, None] * d_inv_sqrt[None, :]


if __name__ == "__main__":
    key = jax.random.PRNGKey(0)
    k_adj, k_params, k_fwd = jax.random.split(key, 3)

    # Small but TPU-friendly (lane-dense, 128-multiple) shapes:
    #   n_nodes = 256 (128 users + 128 items), p_dims = [128, 128, 128]
    #   -> embedding dim 128, hidden1 128, hidden2 128; mu/logvar/z are 128-wide
    #   so every store is an unmasked full-lane store.
    n_nodes = 256
    n_users = 128
    p_dims = [128, 128, 128]

    adj = _make_adj(k_adj, n_nodes)
    model = VGAEPallas(adj, n_users, p_dims, dropout=0.2, key=k_params)

    recon, mu, logvar = model.forward(k_fwd, training=True)
    jax.block_until_ready((recon, mu, logvar))

    assert recon.shape == (n_users, n_nodes - n_users)
    assert mu.shape == (n_nodes, p_dims[0])
    assert logvar.shape == (n_nodes, p_dims[0])
    assert bool(jnp.all(jnp.isfinite(recon)))
    assert bool(jnp.all(jnp.isfinite(mu))) and bool(jnp.all(jnp.isfinite(logvar)))

    # Eval path (no dropout, z = mu, no eps stream) must also run clean.
    recon_e, mu_e, logvar_e = model.forward(k_fwd, training=False)
    jax.block_until_ready((recon_e, mu_e, logvar_e))
    assert recon_e.shape == (n_users, n_nodes - n_users)

    print("KERNEL_OK")
</pallas_src>

<mosaic_0001>
module attributes {stable_mosaic.version = 11 : i64} {
  func.func @_feat_dropout_matmul_kernel(%arg0: i32, %arg1: memref<128x128xbf16, #tpu.memory_space<vmem>>, %arg2: memref<128x128xbf16, #tpu.memory_space<vmem>>, %arg3: memref<128x128xbf16, #tpu.memory_space<vmem>>, %arg4: memref<128x128xbf16, #tpu.memory_space<vmem>>) attributes {dimension_semantics = [#tpu.dimension_semantics<parallel>], iteration_bounds = array<i64: 2>, scalar_prefetch = 0 : i64, scratch_operands = 0 : i64, tpu.core_type = #tpu.core_type<tc>, window_params = [{transform_indices = @transform_0, window_bounds = array<i64: 128, 128>}, {transform_indices = @transform_1, window_bounds = array<i64: 128, 128>}, {pipeline_mode = #tpu.pipeline_mode<synchronous>, transform_indices = @transform_2, window_bounds = array<i64: 128, 128>}, {transform_indices = @transform_3, window_bounds = array<i64: 128, 128>}]} {
    %c0 = arith.constant 0 : index
    %c0_0 = arith.constant 0 : index
    %0 = vector.load %arg1[%c0, %c0_0] : memref<128x128xbf16, #tpu.memory_space<vmem>>, vector<128x128xbf16>
    %c0_1 = arith.constant 0 : index
    %c0_2 = arith.constant 0 : index
    %1 = vector.load %arg2[%c0_1, %c0_2] : memref<128x128xbf16, #tpu.memory_space<vmem>>, vector<128x128xbf16>
    %2 = arith.mulf %0, %1 : vector<128x128xbf16>
    %c0_3 = arith.constant 0 : index
    %c0_4 = arith.constant 0 : index
    %3 = vector.load %arg3[%c0_3, %c0_4] : memref<128x128xbf16, #tpu.memory_space<vmem>>, vector<128x128xbf16>
    %cst = arith.constant dense<0.000000e+00> : vector<128x128xf32>
    %4 = tpu.matmul %2, %3, %cst {dimension_numbers = #tpu.dot_dimension_numbers<[1], [0], [0], [1], [0, 0, 1, 1], [], []>} : vector<128x128xbf16>, vector<128x128xbf16>, vector<128x128xf32> -> vector<128x128xf32>
    %5 = arith.truncf %4 : vector<128x128xf32> to vector<128x128xbf16>
    %c0_5 = arith.constant 0 : index
    %c0_6 = arith.constant 0 : index
    %6 = vector.load %arg4[%c0_5, %c0_6] : memref<128x128xbf16, #tpu.memory_space<vmem>>, vector<128x128xbf16>
    tpu.vector_store %arg4[%c0_5, %c0_6], %5 {strides = array<i32>} : memref<128x128xbf16, #tpu.memory_space<vmem>>, vector<128x128xbf16>,
    return
  }
  func.func @transform_0(%arg0: i32) -> (i32, i32) {
    %c0_i32 = arith.constant 0 : i32
    %c0_i32_0 = arith.constant 0 : i32
    return %arg0, %c0_i32 : i32, i32
  }
  func.func @transform_1(%arg0: i32) -> (i32, i32) {
    %c0_i32 = arith.constant 0 : i32
    %c0_i32_0 = arith.constant 0 : i32
    return %arg0, %c0_i32 : i32, i32
  }
  func.func @transform_2(%arg0: i32) -> (i32, i32) {
    %c0_i32 = arith.constant 0 : i32
    %c0_i32_0 = arith.constant 0 : i32
    %c0_i32_1 = arith.constant 0 : i32
    return %c0_i32, %c0_i32_0 : i32, i32
  }
  func.func @transform_3(%arg0: i32) -> (i32, i32) {
    %c0_i32 = arith.constant 0 : i32
    %c0_i32_0 = arith.constant 0 : i32
    return %arg0, %c0_i32 : i32, i32
  }
}

</mosaic_0001>

<llo_original>
// kernel: tpu_custom_call.1
$region0: #{tpu_custom_call.1}
  #allocation0 [shape = 'u32[]', space=smem, size = 0x4, offset = 0x4, fixed_abs, tag = 'smem constant byte address 0x4 - core index']
  #allocation1 [shape = 'u32[144,128]{1,0:T(1,128)}', space=vmem, size = 0x12000, scoped, tag = 'internal scratch']
  %s0 = inlined_call_operand.hbm [shape: bf16[256,128], index: 0, kind: input, shape index: {}]
  %s1 = inlined_call_operand.hbm [shape: bf16[256,128], index: 1, kind: input, shape index: {}]
  %s2 = inlined_call_operand.hbm [shape: bf16[128,128], index: 2, kind: input, shape index: {}]
  %s3 = inlined_call_operand.hbm [shape: bf16[256,128], index: 3, kind: output, shape index: {}]
  %s4 = sld [smem:[#allocation0]]
  $region57: #{tpu_custom_call.1} parent=0
    _
  %s6 = ssub.s32 1, %s4
  %s7 = scalar_select 0, %s6, %s4
  $region1: #{tpu_custom_call.1} parent=0
    #allocation2 [shape = 'u8[65536]{0}', space=vmem, size = 0x10000, scoped, tag = 'input window, operand 0']
    #allocation3 [shape = 's32[2]{0}', space=sflag, size = 0x8, scoped, tag = 'scoped memory for tpu_custom_call.1']
    #allocation4 [shape = 's32[2]{0}', space=sflag, size = 0x8, scoped, tag = 'scoped memory for tpu_custom_call.1']
    #allocation5 [shape = 'u8[65536]{0}', space=vmem, size = 0x10000, scoped, tag = 'input window, operand 1']
    #allocation6 [shape = 's32[2]{0}', space=sflag, size = 0x8, scoped, tag = 'scoped memory for tpu_custom_call.1']
    #allocation7 [shape = 'u8[32768]{0}', space=vmem, size = 0x8000, scoped, tag = 'input window, operand 2, single buffered']
    #allocation8 [shape = 'u8[65536]{0}', space=vmem, size = 0x10000, scoped, tag = 'output window, operand 0']
    %8 = vsyncpa [#allocation3], 0
    %s9 = scalar_lea.sflag [#allocation3], 1
    %10 = vsyncpa %s9, 0
    %11 = vsyncpa [#allocation6], 0
    %s12 = scalar_lea.sflag [#allocation6], 1
    %13 = vsyncpa %s12, 0
    %14 = vsyncpa [#allocation4], 0
    %s15 = scalar_lea.sflag [#allocation4], 1
    %16 = vsyncpa %s15, 0
    loop: start=0, step=1, limit=4
    $region2: #{tpu_custom_call.1} parent=1 // loop_pre_header
      _
    $region3: #{tpu_custom_call.1} parent=1 // loop_header
      %s18 = sphi 0, %s22
      %p19 = scmp.ge.s32.totalorder %s18, 4
      %s28 = sphi 0, %s30
      %s31 = sphi 0, %s28
      %s32 = sphi 0, %s31
      %s48 = sphi 0, %s32
      %s54 = sphi 0, %s56
      %s57 = sphi 0, %s54
      %s58 = sphi 0, %s57
      %s74 = sphi 0, %s58
      %s78 = sphi 0, %s78
      %s80 = sphi 0, %s78
      %s81 = sphi 0, %s80
      %s95 = sphi 0, %s81
      %s101 = sphi 0, %s103
      %s104 = sphi 0, %s101
      %s105 = sphi 0, %s104
      %s121 = sphi 0, %s105
    $region4: #{tpu_custom_call.1} parent=1 // loop_header_branch
      %21 = sbr.rel (%p19) target = $region8
    $region5: #{tpu_custom_call.1} parent=1 // loop_body
      %s23 = ssub.s32 %s18, 1
      %s24 = ssub.s32 %s18, 2
      %s25 = sadd.s32 %s18, 1
      %s26 = ssub.s32 %s18, %s25
      %p27 = scmp.eq.s32.totalorder %s26, 0
      %s29 = sadd.s32 %s28, 1
      %s30 = scalar_select %p27, %s28, %s29
      %p33 = pneg %p27
      %p34 = scmp.eq.s32.totalorder %s18, 1
      %p35 = por %p33, %p34
      %p36 = scmp.ne.s32.totalorder %s28, %s31
      %p37 = scmp.eq.s32.totalorder %s18, 0
      %p38 = por %p36, %p37
      %p39 = scmp.ne.s32.totalorder %s28, %s31
      %p40 = scmp.eq.s32.totalorder %s23, 1
      %p41 = por %p39, %p40
      %p42 = scmp.ne.s32.totalorder %s31, %s32
      %p43 = scmp.eq.s32.totalorder %s23, 0
      %p44 = por %p42, %p43
      %p45 = scmp.ne.s32.totalorder %s31, %s32
      %p46 = scmp.eq.s32.totalorder %s24, 1
      %p47 = por %p45, %p46
      %p49 = scmp.ne.s32.totalorder %s32, %s48
      %p50 = scmp.eq.s32.totalorder %s24, 0
      %p51 = por %p49, %p50
      %s52 = ssub.s32 %s18, %s25
      %p53 = scmp.eq.s32.totalorder %s52, 0
      %s55 = sadd.s32 %s54, 1
      %s56 = scalar_select %p53, %s54, %s55
      %p59 = pneg %p53
      %p60 = scmp.eq.s32.totalorder %s18, 1
      %p61 = por %p59, %p60
      %p62 = scmp.ne.s32.totalorder %s54, %s57
      %p63 = scmp.eq.s32.totalorder %s18, 0
      %p64 = por %p62, %p63
      %p65 = scmp.ne.s32.totalorder %s54, %s57
      %p66 = scmp.eq.s32.totalorder %s23, 1
      %p67 = por %p65, %p66
      %p68 = scmp.ne.s32.totalorder %s57, %s58
      %p69 = scmp.eq.s32.totalorder %s23, 0
      %p70 = por %p68, %p69
      %p71 = scmp.ne.s32.totalorder %s57, %s58
      %p72 = scmp.eq.s32.totalorder %s24, 1
      %p73 = por %p71, %p72
      %p75 = scmp.ne.s32.totalorder %s58, %s74
      %p76 = scmp.eq.s32.totalorder %s24, 0
      %p77 = por %p75, %p76
      %s79 = sadd.s32 %s78, 1
      %p82 = scmp.eq.s32.totalorder %s18, 1
      %p83 = scmp.ne.s32.totalorder %s78, %s80
      %p84 = scmp.eq.s32.totalorder %s18, 0
      %p85 = por %p83, %p84
      %p86 = scmp.ne.s32.totalorder %s78, %s80
      %p87 = scmp.eq.s32.totalorder %s23, 1
      %p88 = por %p86, %p87
      %p89 = scmp.ne.s32.totalorder %s80, %s81
      %p90 = scmp.eq.s32.totalorder %s23, 0
      %p91 = por %p89, %p90
      %p92 = scmp.ne.s32.totalorder %s80, %s81
      %p93 = scmp.eq.s32.totalorder %s24, 1
      %p94 = por %p92, %p93
      %p96 = scmp.ne.s32.totalorder %s81, %s95
      %p97 = scmp.eq.s32.totalorder %s24, 0
      %p98 = por %p96, %p97
      %s99 = ssub.s32 %s18, %s25
      %p100 = scmp.eq.s32.totalorder %s99, 0
      %s102 = sadd.s32 %s101, 1
      %s103 = scalar_select %p100, %s101, %s102
      %p106 = pneg %p100
      %p107 = scmp.eq.s32.totalorder %s18, 1
      %p108 = por %p106, %p107
      %p109 = scmp.ne.s32.totalorder %s101, %s104
      %p110 = scmp.eq.s32.totalorder %s18, 0
      %p111 = por %p109, %p110
      %p112 = scmp.ne.s32.totalorder %s101, %s104
      %p113 = scmp.eq.s32.totalorder %s23, 1
      %p114 = por %p112, %p113
      %p115 = scmp.ne.s32.totalorder %s104, %s105
      %p116 = scmp.eq.s32.totalorder %s23, 0
      %p117 = por %p115, %p116
      %p118 = scmp.ne.s32.totalorder %s104, %s105
      %p119 = scmp.eq.s32.totalorder %s24, 1
      %p120 = por %p118, %p119
      %p122 = scmp.ne.s32.totalorder %s105, %s121
      %p123 = scmp.eq.s32.totalorder %s24, 0
      %p124 = por %p122, %p123
      %p125 = scmp.le.s32.totalorder 1, %s18
      %p126 = scmp.lt.s32.totalorder %s18, 3
      %p127 = pnand %p125, %p126
      %p128 = pneg %p127
      // Predicated region
      $region9: #{tpu_custom_call.1} parent=5 // pred_check
        _
      $region10: #{tpu_custom_call.1} parent=5 // pred_check_branch
        %130 = sbr.rel (%p127) target = $region12
      $region11: #{tpu_custom_call.1} parent=5 // pred_region
        %s131 = ssub.s32 %s18, 1
        // Predicated region
        $region13: #{tpu_custom_call.1} parent=11 // pred_check
          %p132 = pneg %p91
        $region14: #{tpu_custom_call.1} parent=11 // pred_check_branch
          %134 = sbr.rel (%p132) target = $region16
        $region15: #{tpu_custom_call.1} parent=11 // pred_region
          %s136 = ssub.s32 1024, 1024
          %137 = vsyncadd [#allocation6], %s136
          %s138 = sshll.u32 [#allocation7], 4
          %s139 = int_to_ptr.vmem [resolvable:$true] %s138
          %144 = dma.hbm_to_vmem [thread:$0]  %s2, 1024, %s139, [#allocation6], 64, 64, 4
        $region16: #{tpu_custom_call.1} parent=11 // pred_fallthru
          _
      $region12: #{tpu_custom_call.1} parent=5 // pred_fallthru
        _
      %p145 = scmp.lt.s32.totalorder %s18, 2
      // Predicated region
      $region17: #{tpu_custom_call.1} parent=5 // pred_check
        %p146 = pneg %p145
      $region18: #{tpu_custom_call.1} parent=5 // pred_check_branch
        %148 = sbr.rel (%p146) target = $region20
      $region19: #{tpu_custom_call.1} parent=5 // pred_region
        // Predicated region
        $region21: #{tpu_custom_call.1} parent=19 // pred_check
          %p149 = pneg %p38
        $region22: #{tpu_custom_call.1} parent=19 // pred_check_branch
          %151 = sbr.rel (%p149) target = $region24
        $region23: #{tpu_custom_call.1} parent=19 // pred_region
          %s152 = sand.u32 %s28, 1
          %s153 = scalar_lea.sflag [#allocation3], %s152
          %s154 = sand.u32 %s28, 1
          %s155 = smul.addr %s154, 64
          %s156 = scalar_lea.vmem [#allocation2], %s155
          %s157 = smul.u32 16, %s18
          %s159 = ssub.s32 1024, 1024
          %160 = vsyncadd %s153, %s159
          %s161 = smul.addr %s157, 64
          %s162 = scalar_lea.hbm %s0, %s161
          %s163 = sshll.u32 %s156, 4
          %s164 = int_to_ptr.vmem [resolvable:$true] %s163
          %169 = dma.hbm_to_vmem [thread:$0]  %s162, 1024, %s164, %s153, 64, 64, 4
        $region24: #{tpu_custom_call.1} parent=19 // pred_fallthru
          _
        // Predicated region
        $region25: #{tpu_custom_call.1} parent=19 // pred_check
          %p170 = pneg %p64
        $region26: #{tpu_custom_call.1} parent=19 // pred_check_branch
          %172 = sbr.rel (%p170) target = $region28
        $region27: #{tpu_custom_call.1} parent=19 // pred_region
          %s173 = sand.u32 %s18, 1
          %s174 = scalar_lea.sflag [#allocation6], %s173
          %s175 = sand.u32 %s54, 1
          %s176 = smul.addr %s175, 64
          %s177 = scalar_lea.vmem [#allocation5], %s176
          %s178 = smul.u32 16, %s18
          %s180 = ssub.s32 1024, 1024
          %181 = vsyncadd %s174, %s180
          %s182 = smul.addr %s178, 64
          %s183 = scalar_lea.hbm %s1, %s182
          %s184 = sshll.u32 %s177, 4
          %s185 = int_to_ptr.vmem [resolvable:$true] %s184
          %190 = dma.hbm_to_vmem [thread:$0]  %s183, 1024, %s185, %s174, 64, 64, 4
        $region28: #{tpu_custom_call.1} parent=19 // pred_fallthru
          _
      $region20: #{tpu_custom_call.1} parent=5 // pred_fallthru
        _
      %p191 = scmp.le.s32.totalorder 1, %s18
      %p192 = scmp.lt.s32.totalorder %s18, 3
      %p193 = pnand %p191, %p192
      %p194 = pneg %p193
      // Predicated region
      $region29: #{tpu_custom_call.1} parent=5 // pred_check
        _
      $region30: #{tpu_custom_call.1} parent=5 // pred_check_branch
        %196 = sbr.rel (%p193) target = $region32
      $region31: #{tpu_custom_call.1} parent=5 // pred_region
        %s197 = ssub.s32 %s18, 1
        %s198 = sand.u32 %s31, 1
        %s199 = scalar_lea.sflag [#allocation3], %s198
        %s200 = sand.u32 %s31, 1
        %s201 = smul.addr %s200, 64
        %s202 = scalar_lea.vmem [#allocation2], %s201
        // Predicated region
        $region33: #{tpu_custom_call.1} parent=31 // pred_check
          %p203 = pneg %p44
        $region34: #{tpu_custom_call.1} parent=31 // pred_check_branch
          %205 = sbr.rel (%p203) target = $region36
        $region35: #{tpu_custom_call.1} parent=31 // pred_region
          %206 = dma.done %s199, 1024
        $region36: #{tpu_custom_call.1} parent=31 // pred_fallthru
          _
        %s207 = sand.u32 %s23, 1
        %s208 = scalar_lea.sflag [#allocation6], %s207
        %s209 = sand.u32 %s57, 1
        %s210 = smul.addr %s209, 64
        %s211 = scalar_lea.vmem [#allocation5], %s210
        // Predicated region
        $region37: #{tpu_custom_call.1} parent=31 // pred_check
          %p212 = pneg %p70
        $region38: #{tpu_custom_call.1} parent=31 // pred_check_branch
          %214 = sbr.rel (%p212) target = $region40
        $region39: #{tpu_custom_call.1} parent=31 // pred_region
          %215 = dma.done %s208, 1024
        $region40: #{tpu_custom_call.1} parent=31 // pred_fallthru
          _
        // Predicated region
        $region41: #{tpu_custom_call.1} parent=31 // pred_check
          %p216 = pneg %p91
        $region42: #{tpu_custom_call.1} parent=31 // pred_check_branch
          %218 = sbr.rel (%p216) target = $region44
        $region43: #{tpu_custom_call.1} parent=31 // pred_region
          %219 = dma.done [#allocation6], 1024
        $region44: #{tpu_custom_call.1} parent=31 // pred_fallthru
          _
        %s220 = sand.u32 %s31, 1
        %s221 = scalar_lea.sflag [#allocation3], %s220
        %s222 = sand.u32 %s31, 1
        %s223 = smul.addr %s222, 64
        %s224 = scalar_lea.vmem [#allocation2], %s223
        %p225 = pneg %p44
        %p226 = pneg %p41
        %s227 = sand.u32 %s23, 1
        %s228 = scalar_lea.sflag [#allocation6], %s227
        %s229 = sand.u32 %s57, 1
        %s230 = smul.addr %s229, 64
        %s231 = scalar_lea.vmem [#allocation5], %s230
        %p232 = pneg %p70
        %p233 = pneg %p67
        %p234 = pneg %p91
        %p235 = pneg %p88
        %p236 = pneg %p117
        %p237 = pneg %p114
        %s238 = sand.u32 %s104, 1
        %s239 = scalar_lea.sflag [#allocation4], %s238
        %s240 = sand.u32 %s104, 1
        %s241 = smul.addr %s240, 64
        %s242 = scalar_lea.vmem [#allocation8], %s241
        %s243 = smul.u32 16, %s23
        %s244 = smul.u32 16, %s23
        %s245 = smul.u32 16, %s23
        %v247 = vld [vmem:[%s202] sm:$0xf]
        %v248 = vld [vmem:[%s202 + $0x4] sm:$0xf]
        %v249 = vld [vmem:[%s202 + $0x8] sm:$0xf]
        %v250 = vld [vmem:[%s202 + $0xc] sm:$0xf]
        %v251 = vld [vmem:[%s202 + $0x10] sm:$0xf]
        %v252 = vld [vmem:[%s202 + $0x14] sm:$0xf]
        %v253 = vld [vmem:[%s202 + $0x18] sm:$0xf]
        %v254 = vld [vmem:[%s202 + $0x1c] sm:$0xf]
        %v255 = vld [vmem:[%s202 + $0x20] sm:$0xf]
        %v256 = vld [vmem:[%s202 + $0x24] sm:$0xf]
        %v257 = vld [vmem:[%s202 + $0x28] sm:$0xf]
        %v258 = vld [vmem:[%s202 + $0x2c] sm:$0xf]
        %v259 = vld [vmem:[%s202 + $0x30] sm:$0xf]
        %v260 = vld [vmem:[%s202 + $0x34] sm:$0xf]
        %v261 = vld [vmem:[%s202 + $0x38] sm:$0xf]
        %v262 = vld [vmem:[%s202 + $0x3c] sm:$0xf]
        %v263 = vld [vmem:[%s211] sm:$0xf]
        %v264 = vld [vmem:[%s211 + $0x4] sm:$0xf]
        %v265 = vld [vmem:[%s211 + $0x8] sm:$0xf]
        %v266 = vld [vmem:[%s211 + $0xc] sm:$0xf]
        %v267 = vld [vmem:[%s211 + $0x10] sm:$0xf]
        %v268 = vld [vmem:[%s211 + $0x14] sm:$0xf]
        %v269 = vld [vmem:[%s211 + $0x18] sm:$0xf]
        %v270 = vld [vmem:[%s211 + $0x1c] sm:$0xf]
        %v271 = vld [vmem:[%s211 + $0x20] sm:$0xf]
        %v272 = vld [vmem:[%s211 + $0x24] sm:$0xf]
        %v273 = vld [vmem:[%s211 + $0x28] sm:$0xf]
        %v274 = vld [vmem:[%s211 + $0x2c] sm:$0xf]
        %v275 = vld [vmem:[%s211 + $0x30] sm:$0xf]
        %v276 = vld [vmem:[%s211 + $0x34] sm:$0xf]
        %v277 = vld [vmem:[%s211 + $0x38] sm:$0xf]
        %v278 = vld [vmem:[%s211 + $0x3c] sm:$0xf]
        %v279 = vmul.bf16 %v247, %v263
        %v280 = vmul.bf16 %v248, %v264
        %v281 = vmul.bf16 %v249, %v265
        %v282 = vmul.bf16 %v250, %v266
        %v283 = vmul.bf16 %v251, %v267
        %v284 = vmul.bf16 %v252, %v268
        %v285 = vmul.bf16 %v253, %v269
        %v286 = vmul.bf16 %v254, %v270
        %v287 = vmul.bf16 %v255, %v271
        %v288 = vmul.bf16 %v256, %v272
        %v289 = vmul.bf16 %v257, %v273
        %v290 = vmul.bf16 %v258, %v274
        %v291 = vmul.bf16 %v259, %v275
        %v292 = vmul.bf16 %v260, %v276
        %v293 = vmul.bf16 %v261, %v277
        %v294 = vmul.bf16 %v262, %v278
        %v295 = vld [vmem:[#allocation7] sm:$0xf]
        %v296 = vld [vmem:[#allocation7 + $0x4] sm:$0xf]
        %v297 = vld [vmem:[#allocation7 + $0x8] sm:$0xf]
        %v298 = vld [vmem:[#allocation7 + $0xc] sm:$0xf]
        %v299 = vld [vmem:[#allocation7 + $0x10] sm:$0xf]
        %v300 = vld [vmem:[#allocation7 + $0x14] sm:$0xf]
        %v301 = vld [vmem:[#allocation7 + $0x18] sm:$0xf]
        %v302 = vld [vmem:[#allocation7 + $0x1c] sm:$0xf]
        %v303 = vld [vmem:[#allocation7 + $0x20] sm:$0xf]
        %v304 = vld [vmem:[#allocation7 + $0x24] sm:$0xf]
        %v305 = vld [vmem:[#allocation7 + $0x28] sm:$0xf]
        %v306 = vld [vmem:[#allocation7 + $0x2c] sm:$0xf]
        %v307 = vld [vmem:[#allocation7 + $0x30] sm:$0xf]
        %v308 = vld [vmem:[#allocation7 + $0x34] sm:$0xf]
        %v309 = vld [vmem:[#allocation7 + $0x38] sm:$0xf]
        %v310 = vld [vmem:[#allocation7 + $0x3c] sm:$0xf]
        %v327 = vunpack.c.l.b16 %v279
        %v328 = vunpack.c.l.b16 %v280
        %v329 = vunpack.c.l.b16 %v281
        %v330 = vunpack.c.l.b16 %v282
        %v331 = vunpack.c.l.b16 %v283
        %v332 = vunpack.c.l.b16 %v284
        %v333 = vunpack.c.l.b16 %v285
        %v334 = vunpack.c.l.b16 %v286
        %v335 = vunpack.c.l.b16 %v287
        %v336 = vunpack.c.l.b16 %v288
        %v337 = vunpack.c.l.b16 %v289
        %v338 = vunpack.c.l.b16 %v290
        %v339 = vunpack.c.l.b16 %v291
        %v340 = vunpack.c.l.b16 %v292
        %v341 = vunpack.c.l.b16 %v293
        %v342 = vunpack.c.l.b16 %v294
        %v343 = vpack.c.b16 %v328, %v327
        %v344 = vpack.c.b16 %v330, %v329
        %v345 = vpack.c.b16 %v332, %v331
        %v346 = vpack.c.b16 %v334, %v333
        %v347 = vpack.c.b16 %v336, %v335
        %v348 = vpack.c.b16 %v338, %v337
        %v349 = vpack.c.b16 %v340, %v339
        %v350 = vpack.c.b16 %v342, %v341
        %v375 = vunpack.c.l.b16 %v295
        %v376 = vunpack.c.l.b16 %v296
        %v377 = vunpack.c.l.b16 %v297
        %v378 = vunpack.c.l.b16 %v298
        %v379 = vunpack.c.l.b16 %v299
        %v380 = vunpack.c.l.b16 %v300
        %v381 = vunpack.c.l.b16 %v301
        %v382 = vunpack.c.l.b16 %v302
        %v383 = vunpack.c.l.b16 %v303
        %v384 = vunpack.c.l.b16 %v304
        %v385 = vunpack.c.l.b16 %v305
        %v386 = vunpack.c.l.b16 %v306
        %v387 = vunpack.c.l.b16 %v307
        %v388 = vunpack.c.l.b16 %v308
        %v389 = vunpack.c.l.b16 %v309
        %v390 = vunpack.c.l.b16 %v310
        %v391 = vpack.c.b16 %v376, %v375
        %v392 = vpack.c.b16 %v378, %v377
        %v393 = vpack.c.b16 %v380, %v379
        %v394 = vpack.c.b16 %v382, %v381
        %v395 = vpack.c.b16 %v384, %v383
        %v396 = vpack.c.b16 %v386, %v385
        %v397 = vpack.c.b16 %v388, %v387
        %v398 = vpack.c.b16 %v390, %v389
        %407 = vmatprep.subr.bf16.mxu0 0
        %408 = vmatpush1.bf16.msra.mxu0 %v391
        %409 = vmatprep.subr.bf16.mxu0 0
        %410 = vmatpush1.bf16.msra.mxu0 %v392
        %411 = vmatprep.subr.bf16.mxu0 0
        %412 = vmatpush1.bf16.msra.mxu0 %v393
        %413 = vmatprep.subr.bf16.mxu0 0
        %414 = vmatpush1.bf16.msra.mxu0 %v394
        %415 = vmatprep.subr.bf16.mxu0 0
        %416 = vmatpush1.bf16.msra.mxu0 %v395
        %417 = vmatprep.subr.bf16.mxu0 0
        %418 = vmatpush1.bf16.msra.mxu0 %v396
        %419 = vmatprep.subr.bf16.mxu0 0
        %420 = vmatpush1.bf16.msra.mxu0 %v397
        %421 = vmatprep.subr.bf16.mxu0 0
        %422 = vmatpush1.bf16.msra.mxu0 %v398
        %423 = vmatprep.subr.bf16.mxu0 0
        %424 = vmatpush1.bf16.msra.mxu0 0
        %425 = vmatprep.subr.bf16.mxu0 0
        %426 = vmatpush1.bf16.msra.mxu0 0
        %427 = vmatprep.subr.bf16.mxu0 0
        %428 = vmatpush1.bf16.msra.mxu0 0
        %429 = vmatprep.subr.bf16.mxu0 0
        %430 = vmatpush1.bf16.msra.mxu0 0
        %431 = vmatprep.subr.bf16.mxu0 0
        %432 = vmatpush1.bf16.msra.mxu0 0
        %433 = vmatprep.subr.bf16.mxu0 0
        %434 = vmatpush1.bf16.msra.mxu0 0
        %435 = vmatprep.subr.bf16.mxu0 0
        %436 = vmatpush1.bf16.msra.mxu0 0
        %437 = vmatprep.subr.bf16.mxu0 0
        %438 = vmatpush1.bf16.msra.mxu0 0
        %439 = vmatprep.mubr.bf16.mxu0 0
        %440 = vmatmul.mubr.bf16.gmra.mrb[0].mxu0 %v343
        %v441 = vpop.f32.mrb[0].mxu0
        %v442 = vadd.f32 0.0, %v441
        %v443 = vpop.f32.mrb[0].mxu0
        %v444 = vpop.f32.mrb[0].mxu0
        %v445 = vadd.f32 0.0, %v444
        %v446 = vpop.f32.mrb[0].mxu0
        %447 = vmatprep.mubr.bf16.mxu0 0
        %448 = vmatmul.mubr.bf16.gmra.mrb[0].mxu0 %v344
        %v449 = vpop.f32.mrb[0].mxu0
        %v450 = vadd.f32 0.0, %v449
        %v451 = vpop.f32.mrb[0].mxu0
        %v452 = vpop.f32.mrb[0].mxu0
        %v453 = vadd.f32 0.0, %v452
        %v454 = vpop.f32.mrb[0].mxu0
        %455 = vmatprep.mubr.bf16.mxu0 0
        %456 = vmatmul.mubr.bf16.gmra.mrb[0].mxu0 %v345
        %v457 = vpop.f32.mrb[0].mxu0
        %v458 = vadd.f32 0.0, %v457
        %v459 = vpop.f32.mrb[0].mxu0
        %v460 = vpop.f32.mrb[0].mxu0
        %v461 = vadd.f32 0.0, %v460
        %v462 = vpop.f32.mrb[0].mxu0
        %463 = vmatprep.mubr.bf16.mxu0 0
        %464 = vmatmul.mubr.bf16.gmra.mrb[0].mxu0 %v346
        %v465 = vpop.f32.mrb[0].mxu0
        %v466 = vadd.f32 0.0, %v465
        %v467 = vpop.f32.mrb[0].mxu0
        %v468 = vpop.f32.mrb[0].mxu0
        %v469 = vadd.f32 0.0, %v468
        %v470 = vpop.f32.mrb[0].mxu0
        %471 = vmatprep.mubr.bf16.mxu0 0
        %472 = vmatmul.mubr.bf16.gmra.mrb[0].mxu0 %v347
        %v473 = vpop.f32.mrb[0].mxu0
        %v474 = vadd.f32 0.0, %v473
        %v475 = vpop.f32.mrb[0].mxu0
        %v476 = vpop.f32.mrb[0].mxu0
        %v477 = vadd.f32 0.0, %v476
        %v478 = vpop.f32.mrb[0].mxu0
        %479 = vmatprep.mubr.bf16.mxu0 0
        %480 = vmatmul.mubr.bf16.gmra.mrb[0].mxu0 %v348
        %v481 = vpop.f32.mrb[0].mxu0
        %v482 = vadd.f32 0.0, %v481
        %v483 = vpop.f32.mrb[0].mxu0
        %v484 = vpop.f32.mrb[0].mxu0
        %v485 = vadd.f32 0.0, %v484
        %v486 = vpop.f32.mrb[0].mxu0
        %487 = vmatprep.mubr.bf16.mxu0 0
        %488 = vmatmul.mubr.bf16.gmra.mrb[0].mxu0 %v349
        %v489 = vpop.f32.mrb[0].mxu0
        %v490 = vadd.f32 0.0, %v489
        %v491 = vpop.f32.mrb[0].mxu0
        %v492 = vpop.f32.mrb[0].mxu0
        %v493 = vadd.f32 0.0, %v492
        %v494 = vpop.f32.mrb[0].mxu0
        %495 = vmatprep.mubr.bf16.mxu0 0
        %496 = vmatmul.mubr.bf16.gmra.mrb[0].mxu0 %v350
        %v497 = vpop.f32.mrb[0].mxu0
        %v498 = vadd.f32 0.0, %v497
        %v499 = vpop.f32.mrb[0].mxu0
        %v500 = vpop.f32.mrb[0].mxu0
        %v501 = vadd.f32 0.0, %v500
        %v502 = vpop.f32.mrb[0].mxu0
        %503 = vdwg.mxu0
        %v504 = vpack.c.bf16 %v445, %v442
        %v505 = vpack.c.bf16 %v453, %v450
        %v506 = vpack.c.bf16 %v461, %v458
        %v507 = vpack.c.bf16 %v469, %v466
        %v508 = vpack.c.bf16 %v477, %v474
        %v509 = vpack.c.bf16 %v485, %v482
        %v510 = vpack.c.bf16 %v493, %v490
        %v511 = vpack.c.bf16 %v501, %v498
        %v520 = vunpack.c.l.b16 %v504
        %v521 = vunpack.c.h.b16 %v504
        %v522 = vunpack.c.l.b16 %v505
        %v523 = vunpack.c.h.b16 %v505
        %v524 = vunpack.c.l.b16 %v506
        %v525 = vunpack.c.h.b16 %v506
        %v526 = vunpack.c.l.b16 %v507
        %v527 = vunpack.c.h.b16 %v507
        %v528 = vunpack.c.l.b16 %v508
        %v529 = vunpack.c.h.b16 %v508
        %v530 = vunpack.c.l.b16 %v509
        %v531 = vunpack.c.h.b16 %v509
        %v532 = vunpack.c.l.b16 %v510
        %v533 = vunpack.c.h.b16 %v510
        %v534 = vunpack.c.l.b16 %v511
        %v535 = vunpack.c.h.b16 %v511
        %v536 = vpack.c.b16 %v520, %v520
        %v537 = vpack.c.b16 %v521, %v521
        %v538 = vpack.c.b16 %v522, %v522
        %v539 = vpack.c.b16 %v523, %v523
        %v540 = vpack.c.b16 %v524, %v524
        %v541 = vpack.c.b16 %v525, %v525
        %v542 = vpack.c.b16 %v526, %v526
        %v543 = vpack.c.b16 %v527, %v527
        %v544 = vpack.c.b16 %v528, %v528
        %v545 = vpack.c.b16 %v529, %v529
        %v546 = vpack.c.b16 %v530, %v530
        %v547 = vpack.c.b16 %v531, %v531
        %v548 = vpack.c.b16 %v532, %v532
        %v549 = vpack.c.b16 %v533, %v533
        %v550 = vpack.c.b16 %v534, %v534
        %v551 = vpack.c.b16 %v535, %v535
        %568 = vst [vmem:[%s242] sm:$0xf] %v536
        %569 = vst [vmem:[%s242 + $0x4] sm:$0xf] %v537
        %570 = vst [vmem:[%s242 + $0x8] sm:$0xf] %v538
        %571 = vst [vmem:[%s242 + $0xc] sm:$0xf] %v539
        %572 = vst [vmem:[%s242 + $0x10] sm:$0xf] %v540
        %573 = vst [vmem:[%s242 + $0x14] sm:$0xf] %v541
        %574 = vst [vmem:[%s242 + $0x18] sm:$0xf] %v542
        %575 = vst [vmem:[%s242 + $0x1c] sm:$0xf] %v543
        %576 = vst [vmem:[%s242 + $0x20] sm:$0xf] %v544
        %577 = vst [vmem:[%s242 + $0x24] sm:$0xf] %v545
        %578 = vst [vmem:[%s242 + $0x28] sm:$0xf] %v546
        %579 = vst [vmem:[%s242 + $0x2c] sm:$0xf] %v547
        %580 = vst [vmem:[%s242 + $0x30] sm:$0xf] %v548
        %581 = vst [vmem:[%s242 + $0x34] sm:$0xf] %v549
        %582 = vst [vmem:[%s242 + $0x38] sm:$0xf] %v550
        %583 = vst [vmem:[%s242 + $0x3c] sm:$0xf] %v551
        %s584 = sand.u32 %s104, 1
        %s585 = scalar_lea.sflag [#allocation4], %s584
        %s586 = sand.u32 %s104, 1
        %s587 = smul.addr %s586, 64
        %s588 = scalar_lea.vmem [#allocation8], %s587
        // Predicated region
        $region45: #{tpu_custom_call.1} parent=31 // pred_check
          %p589 = pneg %p114
        $region46: #{tpu_custom_call.1} parent=31 // pred_check_branch
          %591 = sbr.rel (%p589) target = $region48
        $region47: #{tpu_custom_call.1} parent=31 // pred_region
          %s592 = smul.u32 16, %s23
          %s594 = ssub.s32 1024, 1024
          %595 = vsyncadd %s585, %s594
          %s596 = smul.addr %s592, 64
          %s597 = scalar_lea.hbm %s3, %s596
          %s598 = sshll.u32 %s588, 4
          %s599 = int_to_ptr.vmem [resolvable:$true] %s598
          %604 = dma.vmem_to_hbm [thread:$0]  %s599, 1024, %s597, %s585, 64, 64, 4
        $region48: #{tpu_custom_call.1} parent=31 // pred_fallthru
          _
      $region32: #{tpu_custom_call.1} parent=5 // pred_fallthru
        _
      %p605 = scmp.le.s32.totalorder 2, %s18
      // Predicated region
      $region49: #{tpu_custom_call.1} parent=5 // pred_check
        %p606 = pneg %p605
      $region50: #{tpu_custom_call.1} parent=5 // pred_check_branch
        %608 = sbr.rel (%p606) target = $region52
      $region51: #{tpu_custom_call.1} parent=5 // pred_region
        %s609 = ssub.s32 %s18, 2
        // Predicated region
        $region53: #{tpu_custom_call.1} parent=51 // pred_check
          %p610 = pneg %p120
        $region54: #{tpu_custom_call.1} parent=51 // pred_check_branch
          %612 = sbr.rel (%p610) target = $region56
        $region55: #{tpu_custom_call.1} parent=51 // pred_region
          %s613 = sand.u32 %s105, 1
          %s614 = scalar_lea.sflag [#allocation4], %s613
          %s615 = sand.u32 %s105, 1
          %s616 = smul.addr %s615, 64
          %s617 = scalar_lea.vmem [#allocation8], %s616
          %618 = dma.done %s614, 1024
        $region56: #{tpu_custom_call.1} parent=51 // pred_fallthru
          _
      $region52: #{tpu_custom_call.1} parent=5 // pred_fallthru
        _
    $region6: #{tpu_custom_call.1} parent=1 // loop_footer
      %s22 = sadd.s32 1, %s18
    $region7: #{tpu_custom_call.1} parent=1 // loop_footer_branch
      %17 = sbr.rel target = $region3
    $region8: #{tpu_custom_call.1} parent=1 // loop_exit
      _
    %619 = vsyncpa [#allocation3], 1
    %s620 = scalar_lea.sflag [#allocation3], 1
    %621 = vsyncpa %s620, 1
    %622 = vsyncpa [#allocation6], 1
    %s623 = scalar_lea.sflag [#allocation6], 1
    %624 = vsyncpa %s623, 1
    %625 = vsyncpa [#allocation4], 1
    %s626 = scalar_lea.sflag [#allocation4], 1
    %627 = vsyncpa %s626, 1

</llo_original>
